<compile_context>
chip_gen: v7x
topology: tpu7x:2x2x1
jax: 0.10.0
libtpu: 0.0.40
codegen_flags: <defaults>
</compile_context>

<pallas_src>
import functools

import jax
import jax.numpy as jnp
from jax.experimental import pallas as pl
from jax.experimental.pallas import tpu as pltpu


class Constants:
    DROPOUT = 0.2  # same role as the PyTorch Constants.DROPOUT


_LANE = 128
_SUBLANE = 8
# Conservative working-set budget: fits v7x's 64 MiB physical VMEM with
# headroom and is far below v5e/v6e's 128 MiB.
_VMEM_BUDGET = 44 * 1024 * 1024
_VMEM_LIMIT = 64 * 1024 * 1024


def _round_up(n, m):
    return ((n + m - 1) // m) * m


# ---------------------------------------------------------------------------
# Kernels
# ---------------------------------------------------------------------------
def _ffn_resident_kernel(x_ref, w1_ref, b1_ref, w2_ref, b2_ref, o_ref):
    """Whole FFN for one row tile; W1/W2 stay resident in VMEM (read once)."""
    h = jnp.dot(x_ref[...], w1_ref[...], preferred_element_type=jnp.float32)
    h = jnp.maximum(h + b1_ref[...], 0.0)                        # bias+ReLU, f32
    o_ref[...] = (jnp.dot(h.astype(w2_ref.dtype), w2_ref[...],
                          preferred_element_type=jnp.float32)
                  + b2_ref[...]).astype(o_ref.dtype)


def _ffn_streamed_kernel(x_ref, w1_ref, b1_ref, w2_ref, b2_ref, o_ref):
    """One (row-tile, hidden-tile) step; accumulates directly into the f32
    output block (resident across the k axis -> no scratch accumulator)."""
    k = pl.program_id(1)

    @pl.when(k == 0)
    def _():
        o_ref[...] = jnp.zeros_like(o_ref)

    h = jnp.dot(x_ref[...], w1_ref[...], preferred_element_type=jnp.float32)
    h = jnp.maximum(h + b1_ref[...], 0.0)
    o_ref[...] += jnp.dot(h.astype(w2_ref.dtype), w2_ref[...],
                          preferred_element_type=jnp.float32)

    @pl.when(k == pl.num_programs(1) - 1)
    def _():
        o_ref[...] += b2_ref[...]


# ---------------------------------------------------------------------------
# VMEM working-set estimates (bytes), double-buffering counted conservatively
# ---------------------------------------------------------------------------
def _resident_vmem_bytes(tm, e_pad, h_pad):
    return (4 * e_pad * h_pad * 2          # W1 + W2 bf16 (assume double-buffered)
            + 2 * tm * e_pad * 2           # x tiles (bf16)
            + 2 * tm * e_pad * 4           # out tiles (f32)
            + tm * h_pad * 6               # hidden activations f32 + bf16 copy
            + 4 * _SUBLANE * (h_pad + e_pad) * 4)


def _streamed_vmem_bytes(tm, th, e_pad):
    return (2 * tm * e_pad * 2             # x tiles
            + 2 * e_pad * th * 2           # W1 col-tiles
            + 2 * th * e_pad * 2           # W2 row-tiles
            + 2 * tm * e_pad * 4           # out/acc tiles (f32)
            + tm * th * 6                  # hidden tile f32 + bf16 copy
            + 4 * _SUBLANE * (th + e_pad) * 4)


# ---------------------------------------------------------------------------
# Parameter preparation (hoisted out of the per-call path)
# ---------------------------------------------------------------------------
def prepare_ffn_params(w1, b1, w2, b2):
    """Pad to lane-dense (multiple-of-128) shapes and cast weights to bf16.

    Call once per parameter set and reuse. Zero padding is exact: padded W1
    columns / b1 entries produce hidden units whose W2 rows are zero, so the
    valid output slice is unchanged.
    """
    E, H = w1.shape
    e_pad = _round_up(E, _LANE)
    h_pad = _round_up(H, _LANE)
    bf16, f32 = jnp.bfloat16, jnp.float32

    if E == e_pad and H == h_pad:
        w1p = w1.astype(bf16)
        w2p = w2.astype(bf16)
        b1p = b1.astype(f32).reshape(1, h_pad)
        b2p = b2.astype(f32).reshape(1, e_pad)
    else:
        w1p = jnp.zeros((e_pad, h_pad), bf16).at[:E, :H].set(w1.astype(bf16))
        w2p = jnp.zeros((h_pad, e_pad), bf16).at[:H, :E].set(w2.astype(bf16))
        b1p = jnp.zeros((1, h_pad), f32).at[0, :H].set(b1.astype(f32))
        b2p = jnp.zeros((1, e_pad), f32).at[0, :E].set(b2.astype(f32))
    return w1p, b1p, w2p, b2p


# ---------------------------------------------------------------------------
# Forward pass
# ---------------------------------------------------------------------------
@functools.partial(jax.jit, static_argnames=("tm", "th"))
def feed_forward(x, w1p, b1p, w2p, b2p, *, tm=512, th=1024):
    """x: [B, T, E] -> [B, T, E].  relu(x @ W1 + b1) @ W2 + b2 (dropout = eval identity).

    w1p/b1p/w2p/b2p come from prepare_ffn_params (lane-padded, bf16 weights).
    """
    B, T, E = x.shape
    e_pad, h_pad = w1p.shape
    M = B * T
    f32, bf16 = jnp.float32, jnp.bfloat16

    # ---- row tile selection --------------------------------------------------
    tm_req = max(_SUBLANE, min(tm, _round_up(M, _SUBLANE)))
    if M >= 2 * _SUBLANE:
        # v7x megacore: keep at least 2 tiles on the parallel row axis.
        tm_req = min(tm_req, _round_up((M + 1) // 2, _SUBLANE))

    # ---- weight-resident fast path (weights read from HBM exactly once) -------
    resident_tm = None
    for cand in (tm_req, 512, 256, 128, 64, 32, 16, 8):
        if cand > tm_req or cand % _SUBLANE:
            continue
        if _resident_vmem_bytes(cand, e_pad, h_pad) <= _VMEM_BUDGET:
            resident_tm = cand
            break

    if resident_tm is not None:
        tm_f = resident_tm
        th_f = h_pad
    else:
        # Streamed path: th must divide h_pad and stay a multiple of 128.
        th_f = max(_LANE, (min(th, h_pad) // _LANE) * _LANE)
        while h_pad % th_f:
            th_f -= _LANE
        tm_f = tm_req
        while _streamed_vmem_bytes(tm_f, th_f, e_pad) > _VMEM_BUDGET and th_f > _LANE:
            new_th = th_f // 2
            while new_th >= _LANE and h_pad % new_th:
                new_th -= _LANE
            if new_th < _LANE:
                break
            th_f = new_th
        while _streamed_vmem_bytes(tm_f, th_f, e_pad) > _VMEM_BUDGET and tm_f > _SUBLANE:
            tm_f = max(_SUBLANE, _round_up(tm_f // 2, _SUBLANE))

    M_pad = _round_up(M, tm_f)

    # ---- activation padding (skipped when already aligned) --------------------
    x_flat = x.reshape(M, E)
    if M == M_pad and E == e_pad:
        x2 = x_flat.astype(bf16)
    else:
        x2 = jnp.zeros((M_pad, e_pad), bf16).at[:M, :E].set(x_flat.astype(bf16))

    flops = 2 * M_pad * e_pad * h_pad * 2          # two matmuls

    if resident_tm is not None:
        grid = (M_pad // tm_f,)
        bytes_accessed = (x2.size * 2 + (w1p.size + w2p.size) * 2
                          + (b1p.size + b2p.size) * 4 + M_pad * e_pad * 4)
        out2 = pl.pallas_call(
            _ffn_resident_kernel,
            out_shape=jax.ShapeDtypeStruct((M_pad, e_pad), f32),
            grid_spec=pltpu.PrefetchScalarGridSpec(
                num_scalar_prefetch=0,
                grid=grid,
                in_specs=[
                    pl.BlockSpec((tm_f, e_pad), lambda i: (i, 0)),   # x row-tile
                    pl.BlockSpec((e_pad, h_pad), lambda i: (0, 0)),  # W1 resident
                    pl.BlockSpec((1, h_pad), lambda i: (0, 0)),      # b1 resident
                    pl.BlockSpec((h_pad, e_pad), lambda i: (0, 0)),  # W2 resident
                    pl.BlockSpec((1, e_pad), lambda i: (0, 0)),      # b2 resident
                ],
                out_specs=pl.BlockSpec((tm_f, e_pad), lambda i: (i, 0)),
            ),
            compiler_params=pltpu.CompilerParams(
                dimension_semantics=("parallel",),
                vmem_limit_bytes=_VMEM_LIMIT),
            cost_estimate=pl.CostEstimate(
                flops=flops, transcendentals=0, bytes_accessed=bytes_accessed),
        )(x2, w1p, b1p, w2p, b2p)
    else:
        grid = (M_pad // tm_f, h_pad // th_f)
        n_row_tiles = M_pad // tm_f
        bytes_accessed = (x2.size * 2
                          + n_row_tiles * (w1p.size + w2p.size) * 2   # weight re-stream
                          + n_row_tiles * (b1p.size + b2p.size) * 4
                          + M_pad * e_pad * 4)
        out2 = pl.pallas_call(
            _ffn_streamed_kernel,
            out_shape=jax.ShapeDtypeStruct((M_pad, e_pad), f32),
            grid_spec=pltpu.PrefetchScalarGridSpec(
                num_scalar_prefetch=0,
                grid=grid,
                in_specs=[
                    pl.BlockSpec((tm_f, e_pad), lambda i, k: (i, 0)),   # x row-tile
                    pl.BlockSpec((e_pad, th_f), lambda i, k: (0, k)),   # W1 col-tile
                    pl.BlockSpec((1, th_f), lambda i, k: (0, k)),       # b1 tile
                    pl.BlockSpec((th_f, e_pad), lambda i, k: (k, 0)),   # W2 row-tile
                    pl.BlockSpec((1, e_pad), lambda i, k: (0, 0)),      # b2
                ],
                out_specs=pl.BlockSpec((tm_f, e_pad), lambda i, k: (i, 0)),
            ),
            compiler_params=pltpu.CompilerParams(
                dimension_semantics=("parallel", "arbitrary"),
                vmem_limit_bytes=_VMEM_LIMIT),
            cost_estimate=pl.CostEstimate(
                flops=flops, transcendentals=0, bytes_accessed=bytes_accessed),
        )(x2, w1p, b1p, w2p, b2p)

    out = out2[:M, :E].reshape(B, T, E)
    if out.dtype != x.dtype:
        out = out.astype(x.dtype)
    return out


def init_params(key, number_of_embeddings):
    """Deterministic parameter init matching nn.Linear shapes (stored as x@W)."""
    E = number_of_embeddings
    H = 4 * E
    k1, k2, k3, k4 = jax.random.split(key, 4)
    # PyTorch nn.Linear default init: U(-1/sqrt(fan_in), 1/sqrt(fan_in))
    lim1 = 1.0 / (E ** 0.5)
    lim2 = 1.0 / (H ** 0.5)
    w1 = jax.random.uniform(k1, (E, H), jnp.float32, -lim1, lim1)
    b1 = jax.random.uniform(k2, (H,), jnp.float32, -lim1, lim1)
    w2 = jax.random.uniform(k3, (H, E), jnp.float32, -lim2, lim2)
    b2 = jax.random.uniform(k4, (E,), jnp.float32, -lim2, lim2)
    return w1, b1, w2, b2


if __name__ == "__main__":
    B, T, E = 2, 8, 32          # small shapes consistent with the module
    key = jax.random.PRNGKey(0)
    kx, kp = jax.random.split(key)
    x = jax.random.normal(kx, (B, T, E), jnp.float32)
    w1, b1, w2, b2 = init_params(kp, E)

    params = prepare_ffn_params(w1, b1, w2, b2)   # done once, reused per call
    out = feed_forward(x, *params)
    out = jax.block_until_ready(out)

    # Reference in plain JAX f32 (eval-mode dropout = identity); tolerance
    # loosened for bf16 matmul operands (f32 accumulation kept).
    ref = jnp.maximum(x.reshape(-1, E) @ w1 + b1, 0.0) @ w2 + b2
    ref = ref.reshape(B, T, E)
    assert out.shape == (B, T, E)
    assert jnp.allclose(out, ref, atol=2e-2, rtol=2e-2)

    print("KERNEL_OK")
</pallas_src>

<mosaic_0001>
module attributes {stable_mosaic.version = 11 : i64} {
  func.func @_ffn_resident_kernel(%arg0: i32, %arg1: memref<8x128xbf16, #tpu.memory_space<vmem>>, %arg2: memref<128x128xbf16, #tpu.memory_space<vmem>>, %arg3: memref<1x128xf32, #tpu.memory_space<vmem>>, %arg4: memref<128x128xbf16, #tpu.memory_space<vmem>>, %arg5: memref<1x128xf32, #tpu.memory_space<vmem>>, %arg6: memref<8x128xf32, #tpu.memory_space<vmem>>) attributes {dimension_semantics = [#tpu.dimension_semantics<parallel>], iteration_bounds = array<i64: 2>, scalar_prefetch = 0 : i64, scratch_operands = 0 : i64, tpu.core_type = #tpu.core_type<tc>, window_params = [{transform_indices = @transform_0, window_bounds = array<i64: 8, 128>}, {pipeline_mode = #tpu.pipeline_mode<synchronous>, transform_indices = @transform_1, window_bounds = array<i64: 128, 128>}, {pipeline_mode = #tpu.pipeline_mode<synchronous>, transform_indices = @transform_2, window_bounds = array<i64: 1, 128>}, {pipeline_mode = #tpu.pipeline_mode<synchronous>, transform_indices = @transform_3, window_bounds = array<i64: 128, 128>}, {pipeline_mode = #tpu.pipeline_mode<synchronous>, transform_indices = @transform_4, window_bounds = array<i64: 1, 128>}, {transform_indices = @transform_5, window_bounds = array<i64: 8, 128>}]} {
    %c0 = arith.constant 0 : index
    %c0_0 = arith.constant 0 : index
    %0 = vector.load %arg1[%c0, %c0_0] : memref<8x128xbf16, #tpu.memory_space<vmem>>, vector<8x128xbf16>
    %c0_1 = arith.constant 0 : index
    %c0_2 = arith.constant 0 : index
    %1 = vector.load %arg2[%c0_1, %c0_2] : memref<128x128xbf16, #tpu.memory_space<vmem>>, vector<128x128xbf16>
    %cst = arith.constant dense<0.000000e+00> : vector<8x128xf32>
    %2 = tpu.matmul %0, %1, %cst {dimension_numbers = #tpu.dot_dimension_numbers<[1], [0], [0], [1], [0, 0, 1, 1], [], []>} : vector<8x128xbf16>, vector<128x128xbf16>, vector<8x128xf32> -> vector<8x128xf32>
    %c0_3 = arith.constant 0 : index
    %c0_4 = arith.constant 0 : index
    %3 = vector.load %arg3[%c0_3, %c0_4] : memref<1x128xf32, #tpu.memory_space<vmem>>, vector<1x128xf32>
    %4 = vector.broadcast %3 : vector<1x128xf32> to vector<8x128xf32>
    %5 = arith.addf %2, %4 : vector<8x128xf32>
    %cst_5 = arith.constant 0.000000e+00 : f32
    %6 = vector.broadcast %cst_5 : f32 to vector<8x128xf32>
    %7 = arith.maximumf %5, %6 : vector<8x128xf32>
    %8 = arith.truncf %7 : vector<8x128xf32> to vector<8x128xbf16>
    %c0_6 = arith.constant 0 : index
    %c0_7 = arith.constant 0 : index
    %9 = vector.load %arg4[%c0_6, %c0_7] : memref<128x128xbf16, #tpu.memory_space<vmem>>, vector<128x128xbf16>
    %cst_8 = arith.constant dense<0.000000e+00> : vector<8x128xf32>
    %10 = tpu.matmul %8, %9, %cst_8 {dimension_numbers = #tpu.dot_dimension_numbers<[1], [0], [0], [1], [0, 0, 1, 1], [], []>} : vector<8x128xbf16>, vector<128x128xbf16>, vector<8x128xf32> -> vector<8x128xf32>
    %c0_9 = arith.constant 0 : index
    %c0_10 = arith.constant 0 : index
    %11 = vector.load %arg5[%c0_9, %c0_10] : memref<1x128xf32, #tpu.memory_space<vmem>>, vector<1x128xf32>
    %12 = vector.broadcast %11 : vector<1x128xf32> to vector<8x128xf32>
    %13 = arith.addf %10, %12 : vector<8x128xf32>
    %c0_11 = arith.constant 0 : index
    %c0_12 = arith.constant 0 : index
    %14 = vector.load %arg6[%c0_11, %c0_12] : memref<8x128xf32, #tpu.memory_space<vmem>>, vector<8x128xf32>
    tpu.vector_store %arg6[%c0_11, %c0_12], %13 {strides = array<i32>} : memref<8x128xf32, #tpu.memory_space<vmem>>, vector<8x128xf32>,
    return
  }
  func.func @transform_0(%arg0: i32) -> (i32, i32) {
    %c0_i32 = arith.constant 0 : i32
    %c0_i32_0 = arith.constant 0 : i32
    return %arg0, %c0_i32 : i32, i32
  }
  func.func @transform_1(%arg0: i32) -> (i32, i32) {
    %c0_i32 = arith.constant 0 : i32
    %c0_i32_0 = arith.constant 0 : i32
    %c0_i32_1 = arith.constant 0 : i32
    return %c0_i32, %c0_i32_0 : i32, i32
  }
  func.func @transform_2(%arg0: i32) -> (i32, i32) {
    %c0_i32 = arith.constant 0 : i32
    %c0_i32_0 = arith.constant 0 : i32
    %c0_i32_1 = arith.constant 0 : i32
    return %c0_i32, %c0_i32_0 : i32, i32
  }
  func.func @transform_3(%arg0: i32) -> (i32, i32) {
    %c0_i32 = arith.constant 0 : i32
    %c0_i32_0 = arith.constant 0 : i32
    %c0_i32_1 = arith.constant 0 : i32
    return %c0_i32, %c0_i32_0 : i32, i32
  }
  func.func @transform_4(%arg0: i32) -> (i32, i32) {
    %c0_i32 = arith.constant 0 : i32
    %c0_i32_0 = arith.constant 0 : i32
    %c0_i32_1 = arith.constant 0 : i32
    return %c0_i32, %c0_i32_0 : i32, i32
  }
  func.func @transform_5(%arg0: i32) -> (i32, i32) {
    %c0_i32 = arith.constant 0 : i32
    %c0_i32_0 = arith.constant 0 : i32
    return %arg0, %c0_i32 : i32, i32
  }
}

</mosaic_0001>

<llo_original>
// kernel: feed_forward.1
$region0: #{feed_forward.1}
  #allocation0 [shape = 'u32[]', space=smem, size = 0x4, offset = 0x4, fixed_abs, tag = 'smem constant byte address 0x4 - core index']
  #allocation1 [shape = 'u32[144,128]{1,0:T(1,128)}', space=vmem, size = 0x12000, scoped, tag = 'internal scratch']
  %s0 = inlined_call_operand.hbm [shape: bf16[16,128], index: 0, kind: input, shape index: {}]
  %s1 = inlined_call_operand.hbm [shape: bf16[128,128], index: 1, kind: input, shape index: {}]
  %s2 = inlined_call_operand.hbm [shape: f32[1,128], index: 2, kind: input, shape index: {}]
  %s3 = inlined_call_operand.hbm [shape: bf16[128,128], index: 3, kind: input, shape index: {}]
  %s4 = inlined_call_operand.hbm [shape: f32[1,128], index: 4, kind: input, shape index: {}]
  %s5 = inlined_call_operand.hbm [shape: f32[16,128], index: 5, kind: output, shape index: {}]
  %s6 = sld [smem:[#allocation0]]
  $region73: #{feed_forward.1} parent=0
    _
  %s8 = ssub.s32 1, %s6
  %s9 = scalar_select 0, %s8, %s6
  $region1: #{feed_forward.1} parent=0
    #allocation2 [shape = 'u8[4096]{0}', space=vmem, size = 0x1000, scoped, tag = 'input window, operand 0']
    #allocation3 [shape = 's32[2]{0}', space=sflag, size = 0x8, scoped, tag = 'scoped memory for feed_forward.1']
    #allocation4 [shape = 's32[2]{0}', space=sflag, size = 0x8, scoped, tag = 'scoped memory for feed_forward.1']
    #allocation5 [shape = 'u8[32768]{0}', space=vmem, size = 0x8000, scoped, tag = 'input window, operand 1, single buffered']
    #allocation6 [shape = 's32[1]{0}', space=sflag, size = 0x4, scoped, tag = 'scoped memory for feed_forward.1']
    #allocation7 [shape = 'u8[512]{0}', space=vmem, size = 0x400, scoped, tag = 'input window, operand 2, single buffered']
    #allocation8 [shape = 'u8[32768]{0}', space=vmem, size = 0x8000, scoped, tag = 'input window, operand 3, single buffered']
    #allocation9 [shape = 's32[1]{0}', space=sflag, size = 0x4, scoped, tag = 'scoped memory for feed_forward.1']
    #allocation10 [shape = 'u8[512]{0}', space=vmem, size = 0x400, scoped, tag = 'input window, operand 4, single buffered']
    #allocation11 [shape = 'u8[8192]{0}', space=vmem, size = 0x2000, scoped, tag = 'output window, operand 0']
    %10 = vsyncpa [#allocation3], 0
    %s11 = scalar_lea.sflag [#allocation3], 1
    %12 = vsyncpa %s11, 0
    %13 = vsyncpa [#allocation6], 0
    %14 = vsyncpa [#allocation9], 0
    %15 = vsyncpa [#allocation4], 0
    %s16 = scalar_lea.sflag [#allocation4], 1
    %17 = vsyncpa %s16, 0
    loop: start=0, step=1, limit=4
    $region2: #{feed_forward.1} parent=1 // loop_pre_header
      _
    $region3: #{feed_forward.1} parent=1 // loop_header
      %s19 = sphi 0, %s23
      %p20 = scmp.ge.s32.totalorder %s19, 4
      %s29 = sphi 0, %s31
      %s32 = sphi 0, %s29
      %s33 = sphi 0, %s32
      %s49 = sphi 0, %s33
      %s53 = sphi 0, %s53
      %s55 = sphi 0, %s53
      %s56 = sphi 0, %s55
      %s70 = sphi 0, %s56
      %s74 = sphi 0, %s74
      %s76 = sphi 0, %s74
      %s77 = sphi 0, %s76
      %s91 = sphi 0, %s77
      %s95 = sphi 0, %s95
      %s97 = sphi 0, %s95
      %s98 = sphi 0, %s97
      %s112 = sphi 0, %s98
      %s116 = sphi 0, %s116
      %s118 = sphi 0, %s116
      %s119 = sphi 0, %s118
      %s133 = sphi 0, %s119
      %s139 = sphi 0, %s141
      %s142 = sphi 0, %s139
      %s143 = sphi 0, %s142
      %s159 = sphi 0, %s143
    $region4: #{feed_forward.1} parent=1 // loop_header_branch
      %22 = sbr.rel (%p20) target = $region8
    $region5: #{feed_forward.1} parent=1 // loop_body
      %s24 = ssub.s32 %s19, 1
      %s25 = ssub.s32 %s19, 2
      %s26 = sadd.s32 %s19, 1
      %s27 = ssub.s32 %s19, %s26
      %p28 = scmp.eq.s32.totalorder %s27, 0
      %s30 = sadd.s32 %s29, 1
      %s31 = scalar_select %p28, %s29, %s30
      %p34 = pneg %p28
      %p35 = scmp.eq.s32.totalorder %s19, 1
      %p36 = por %p34, %p35
      %p37 = scmp.ne.s32.totalorder %s29, %s32
      %p38 = scmp.eq.s32.totalorder %s19, 0
      %p39 = por %p37, %p38
      %p40 = scmp.ne.s32.totalorder %s29, %s32
      %p41 = scmp.eq.s32.totalorder %s24, 1
      %p42 = por %p40, %p41
      %p43 = scmp.ne.s32.totalorder %s32, %s33
      %p44 = scmp.eq.s32.totalorder %s24, 0
      %p45 = por %p43, %p44
      %p46 = scmp.ne.s32.totalorder %s32, %s33
      %p47 = scmp.eq.s32.totalorder %s25, 1
      %p48 = por %p46, %p47
      %p50 = scmp.ne.s32.totalorder %s33, %s49
      %p51 = scmp.eq.s32.totalorder %s25, 0
      %p52 = por %p50, %p51
      %s54 = sadd.s32 %s53, 1
      %p57 = scmp.eq.s32.totalorder %s19, 1
      %p58 = scmp.ne.s32.totalorder %s53, %s55
      %p59 = scmp.eq.s32.totalorder %s19, 0
      %p60 = por %p58, %p59
      %p61 = scmp.ne.s32.totalorder %s53, %s55
      %p62 = scmp.eq.s32.totalorder %s24, 1
      %p63 = por %p61, %p62
      %p64 = scmp.ne.s32.totalorder %s55, %s56
      %p65 = scmp.eq.s32.totalorder %s24, 0
      %p66 = por %p64, %p65
      %p67 = scmp.ne.s32.totalorder %s55, %s56
      %p68 = scmp.eq.s32.totalorder %s25, 1
      %p69 = por %p67, %p68
      %p71 = scmp.ne.s32.totalorder %s56, %s70
      %p72 = scmp.eq.s32.totalorder %s25, 0
      %p73 = por %p71, %p72
      %s75 = sadd.s32 %s74, 1
      %p78 = scmp.eq.s32.totalorder %s19, 1
      %p79 = scmp.ne.s32.totalorder %s74, %s76
      %p80 = scmp.eq.s32.totalorder %s19, 0
      %p81 = por %p79, %p80
      %p82 = scmp.ne.s32.totalorder %s74, %s76
      %p83 = scmp.eq.s32.totalorder %s24, 1
      %p84 = por %p82, %p83
      %p85 = scmp.ne.s32.totalorder %s76, %s77
      %p86 = scmp.eq.s32.totalorder %s24, 0
      %p87 = por %p85, %p86
      %p88 = scmp.ne.s32.totalorder %s76, %s77
      %p89 = scmp.eq.s32.totalorder %s25, 1
      %p90 = por %p88, %p89
      %p92 = scmp.ne.s32.totalorder %s77, %s91
      %p93 = scmp.eq.s32.totalorder %s25, 0
      %p94 = por %p92, %p93
      %s96 = sadd.s32 %s95, 1
      %p99 = scmp.eq.s32.totalorder %s19, 1
      %p100 = scmp.ne.s32.totalorder %s95, %s97
      %p101 = scmp.eq.s32.totalorder %s19, 0
      %p102 = por %p100, %p101
      %p103 = scmp.ne.s32.totalorder %s95, %s97
      %p104 = scmp.eq.s32.totalorder %s24, 1
      %p105 = por %p103, %p104
      %p106 = scmp.ne.s32.totalorder %s97, %s98
      %p107 = scmp.eq.s32.totalorder %s24, 0
      %p108 = por %p106, %p107
      %p109 = scmp.ne.s32.totalorder %s97, %s98
      %p110 = scmp.eq.s32.totalorder %s25, 1
      %p111 = por %p109, %p110
      %p113 = scmp.ne.s32.totalorder %s98, %s112
      %p114 = scmp.eq.s32.totalorder %s25, 0
      %p115 = por %p113, %p114
      %s117 = sadd.s32 %s116, 1
      %p120 = scmp.eq.s32.totalorder %s19, 1
      %p121 = scmp.ne.s32.totalorder %s116, %s118
      %p122 = scmp.eq.s32.totalorder %s19, 0
      %p123 = por %p121, %p122
      %p124 = scmp.ne.s32.totalorder %s116, %s118
      %p125 = scmp.eq.s32.totalorder %s24, 1
      %p126 = por %p124, %p125
      %p127 = scmp.ne.s32.totalorder %s118, %s119
      %p128 = scmp.eq.s32.totalorder %s24, 0
      %p129 = por %p127, %p128
      %p130 = scmp.ne.s32.totalorder %s118, %s119
      %p131 = scmp.eq.s32.totalorder %s25, 1
      %p132 = por %p130, %p131
      %p134 = scmp.ne.s32.totalorder %s119, %s133
      %p135 = scmp.eq.s32.totalorder %s25, 0
      %p136 = por %p134, %p135
      %s137 = ssub.s32 %s19, %s26
      %p138 = scmp.eq.s32.totalorder %s137, 0
      %s140 = sadd.s32 %s139, 1
      %s141 = scalar_select %p138, %s139, %s140
      %p144 = pneg %p138
      %p145 = scmp.eq.s32.totalorder %s19, 1
      %p146 = por %p144, %p145
      %p147 = scmp.ne.s32.totalorder %s139, %s142
      %p148 = scmp.eq.s32.totalorder %s19, 0
      %p149 = por %p147, %p148
      %p150 = scmp.ne.s32.totalorder %s139, %s142
      %p151 = scmp.eq.s32.totalorder %s24, 1
      %p152 = por %p150, %p151
      %p153 = scmp.ne.s32.totalorder %s142, %s143
      %p154 = scmp.eq.s32.totalorder %s24, 0
      %p155 = por %p153, %p154
      %p156 = scmp.ne.s32.totalorder %s142, %s143
      %p157 = scmp.eq.s32.totalorder %s25, 1
      %p158 = por %p156, %p157
      %p160 = scmp.ne.s32.totalorder %s143, %s159
      %p161 = scmp.eq.s32.totalorder %s25, 0
      %p162 = por %p160, %p161
      %p163 = scmp.le.s32.totalorder 1, %s19
      %p164 = scmp.lt.s32.totalorder %s19, 3
      %p165 = pnand %p163, %p164
      %p166 = pneg %p165
      // Predicated region
      $region9: #{feed_forward.1} parent=5 // pred_check
        _
      $region10: #{feed_forward.1} parent=5 // pred_check_branch
        %168 = sbr.rel (%p165) target = $region12
      $region11: #{feed_forward.1} parent=5 // pred_region
        %s169 = ssub.s32 %s19, 1
        // Predicated region
        $region13: #{feed_forward.1} parent=11 // pred_check
          %p170 = pneg %p66
        $region14: #{feed_forward.1} parent=11 // pred_check_branch
          %172 = sbr.rel (%p170) target = $region16
        $region15: #{feed_forward.1} parent=11 // pred_region
          %s174 = ssub.s32 1024, 1024
          %175 = vsyncadd [#allocation6], %s174
          %s176 = sshll.u32 [#allocation5], 4
          %s177 = int_to_ptr.vmem [resolvable:$true] %s176
          %182 = dma.hbm_to_vmem [thread:$0]  %s1, 1024, %s177, [#allocation6], 64, 64, 4
        $region16: #{feed_forward.1} parent=11 // pred_fallthru
          _
        // Predicated region
        $region17: #{feed_forward.1} parent=11 // pred_check
          %p183 = pneg %p87
        $region18: #{feed_forward.1} parent=11 // pred_check_branch
          %185 = sbr.rel (%p183) target = $region20
        $region19: #{feed_forward.1} parent=11 // pred_region
          %s187 = ssub.s32 16, 16
          %188 = vsyncadd [#allocation6], %s187
          %s190 = sshll.u32 [#allocation7], 4
          %s191 = int_to_ptr.vmem [resolvable:$true] %s190
          %193 = dma.hbm_to_vmem [thread:$0]  %s2, 16, %s191, [#allocation6]
        $region20: #{feed_forward.1} parent=11 // pred_fallthru
          _
        // Predicated region
        $region21: #{feed_forward.1} parent=11 // pred_check
          %p194 = pneg %p108
        $region22: #{feed_forward.1} parent=11 // pred_check_branch
          %196 = sbr.rel (%p194) target = $region24
        $region23: #{feed_forward.1} parent=11 // pred_region
          %s198 = ssub.s32 1024, 1024
          %199 = vsyncadd [#allocation9], %s198
          %s200 = sshll.u32 [#allocation8], 4
          %s201 = int_to_ptr.vmem [resolvable:$true] %s200
          %206 = dma.hbm_to_vmem [thread:$0]  %s3, 1024, %s201, [#allocation9], 64, 64, 4
        $region24: #{feed_forward.1} parent=11 // pred_fallthru
          _
        // Predicated region
        $region25: #{feed_forward.1} parent=11 // pred_check
          %p207 = pneg %p129
        $region26: #{feed_forward.1} parent=11 // pred_check_branch
          %209 = sbr.rel (%p207) target = $region28
        $region27: #{feed_forward.1} parent=11 // pred_region
          %s211 = ssub.s32 16, 16
          %212 = vsyncadd [#allocation9], %s211
          %s214 = sshll.u32 [#allocation10], 4
          %s215 = int_to_ptr.vmem [resolvable:$true] %s214
          %217 = dma.hbm_to_vmem [thread:$0]  %s4, 16, %s215, [#allocation9]
        $region28: #{feed_forward.1} parent=11 // pred_fallthru
          _
      $region12: #{feed_forward.1} parent=5 // pred_fallthru
        _
      %p218 = scmp.lt.s32.totalorder %s19, 2
      // Predicated region
      $region29: #{feed_forward.1} parent=5 // pred_check
        %p219 = pneg %p218
      $region30: #{feed_forward.1} parent=5 // pred_check_branch
        %221 = sbr.rel (%p219) target = $region32
      $region31: #{feed_forward.1} parent=5 // pred_region
        // Predicated region
        $region33: #{feed_forward.1} parent=31 // pred_check
          %p222 = pneg %p39
        $region34: #{feed_forward.1} parent=31 // pred_check_branch
          %224 = sbr.rel (%p222) target = $region36
        $region35: #{feed_forward.1} parent=31 // pred_region
          %s225 = sand.u32 %s29, 1
          %s226 = scalar_lea.sflag [#allocation3], %s225
          %s227 = sand.u32 %s29, 1
          %s228 = smul.addr %s227, 4
          %s229 = scalar_lea.vmem [#allocation2], %s228
          %s231 = ssub.s32 64, 64
          %232 = vsyncadd %s226, %s231
          %s233 = smul.addr %s19, 64
          %s234 = scalar_lea.hbm %s0, %s233
          %s236 = sshll.u32 %s229, 4
          %s237 = int_to_ptr.vmem [resolvable:$true] %s236
          %239 = dma.hbm_to_vmem [thread:$0]  %s234, 64, %s237, %s226
        $region36: #{feed_forward.1} parent=31 // pred_fallthru
          _
      $region32: #{feed_forward.1} parent=5 // pred_fallthru
        _
      %p240 = scmp.le.s32.totalorder 1, %s19
      %p241 = scmp.lt.s32.totalorder %s19, 3
      %p242 = pnand %p240, %p241
      %p243 = pneg %p242
      // Predicated region
      $region37: #{feed_forward.1} parent=5 // pred_check
        _
      $region38: #{feed_forward.1} parent=5 // pred_check_branch
        %245 = sbr.rel (%p242) target = $region40
      $region39: #{feed_forward.1} parent=5 // pred_region
        %s246 = ssub.s32 %s19, 1
        %s247 = sand.u32 %s32, 1
        %s248 = scalar_lea.sflag [#allocation3], %s247
        %s249 = sand.u32 %s32, 1
        %s250 = smul.addr %s249, 4
        %s251 = scalar_lea.vmem [#allocation2], %s250
        // Predicated region
        $region41: #{feed_forward.1} parent=39 // pred_check
          %p252 = pneg %p45
        $region42: #{feed_forward.1} parent=39 // pred_check_branch
          %254 = sbr.rel (%p252) target = $region44
        $region43: #{feed_forward.1} parent=39 // pred_region
          %255 = dma.done %s248, 64
        $region44: #{feed_forward.1} parent=39 // pred_fallthru
          _
        // Predicated region
        $region45: #{feed_forward.1} parent=39 // pred_check
          %p256 = pneg %p66
        $region46: #{feed_forward.1} parent=39 // pred_check_branch
          %258 = sbr.rel (%p256) target = $region48
        $region47: #{feed_forward.1} parent=39 // pred_region
          %259 = dma.done [#allocation6], 1024
        $region48: #{feed_forward.1} parent=39 // pred_fallthru
          _
        // Predicated region
        $region49: #{feed_forward.1} parent=39 // pred_check
          %p260 = pneg %p87
        $region50: #{feed_forward.1} parent=39 // pred_check_branch
          %262 = sbr.rel (%p260) target = $region52
        $region51: #{feed_forward.1} parent=39 // pred_region
          %263 = dma.done [#allocation6], 16
        $region52: #{feed_forward.1} parent=39 // pred_fallthru
          _
        // Predicated region
        $region53: #{feed_forward.1} parent=39 // pred_check
          %p264 = pneg %p108
        $region54: #{feed_forward.1} parent=39 // pred_check_branch
          %266 = sbr.rel (%p264) target = $region56
        $region55: #{feed_forward.1} parent=39 // pred_region
          %267 = dma.done [#allocation9], 1024
        $region56: #{feed_forward.1} parent=39 // pred_fallthru
          _
        // Predicated region
        $region57: #{feed_forward.1} parent=39 // pred_check
          %p268 = pneg %p129
        $region58: #{feed_forward.1} parent=39 // pred_check_branch
          %270 = sbr.rel (%p268) target = $region60
        $region59: #{feed_forward.1} parent=39 // pred_region
          %271 = dma.done [#allocation9], 16
        $region60: #{feed_forward.1} parent=39 // pred_fallthru
          _
        %s272 = sand.u32 %s32, 1
        %s273 = scalar_lea.sflag [#allocation3], %s272
        %s274 = sand.u32 %s32, 1
        %s275 = smul.addr %s274, 4
        %s276 = scalar_lea.vmem [#allocation2], %s275
        %p277 = pneg %p45
        %p278 = pneg %p42
        %p279 = pneg %p66
        %p280 = pneg %p63
        %p281 = pneg %p87
        %p282 = pneg %p84
        %p283 = pneg %p108
        %p284 = pneg %p105
        %p285 = pneg %p129
        %p286 = pneg %p126
        %p287 = pneg %p155
        %p288 = pneg %p152
        %s289 = sand.u32 %s142, 1
        %s290 = scalar_lea.sflag [#allocation4], %s289
        %s291 = sand.u32 %s142, 1
        %s292 = smul.addr %s291, 8
        %s293 = scalar_lea.vmem [#allocation11], %s292
        %v295 = vld [vmem:[%s251] sm:$0xf]
        %v296 = vld [vmem:[#allocation5] sm:$0xf]
        %v297 = vld [vmem:[#allocation5 + $0x4] sm:$0xf]
        %v298 = vld [vmem:[#allocation5 + $0x8] sm:$0xf]
        %v299 = vld [vmem:[#allocation5 + $0xc] sm:$0xf]
        %v300 = vld [vmem:[#allocation5 + $0x10] sm:$0xf]
        %v301 = vld [vmem:[#allocation5 + $0x14] sm:$0xf]
        %v302 = vld [vmem:[#allocation5 + $0x18] sm:$0xf]
        %v303 = vld [vmem:[#allocation5 + $0x1c] sm:$0xf]
        %v304 = vld [vmem:[#allocation5 + $0x20] sm:$0xf]
        %v305 = vld [vmem:[#allocation5 + $0x24] sm:$0xf]
        %v306 = vld [vmem:[#allocation5 + $0x28] sm:$0xf]
        %v307 = vld [vmem:[#allocation5 + $0x2c] sm:$0xf]
        %v308 = vld [vmem:[#allocation5 + $0x30] sm:$0xf]
        %v309 = vld [vmem:[#allocation5 + $0x34] sm:$0xf]
        %v310 = vld [vmem:[#allocation5 + $0x38] sm:$0xf]
        %v311 = vld [vmem:[#allocation5 + $0x3c] sm:$0xf]
        %v312 = vld [vmem:[#allocation7] sm:$0x1]
        %v314 = vlaneseq
        %v315 = vshrl.u32 %v314, 7
        %v316 = vsub.s32 0, %v315
        %v317 = vrot.slane %v312, %v316
        %v335 = vunpack.c.l.b16 %v296
        %v336 = vunpack.c.l.b16 %v297
        %v337 = vunpack.c.l.b16 %v298
        %v338 = vunpack.c.l.b16 %v299
        %v339 = vunpack.c.l.b16 %v300
        %v340 = vunpack.c.l.b16 %v301
        %v341 = vunpack.c.l.b16 %v302
        %v342 = vunpack.c.l.b16 %v303
        %v343 = vunpack.c.l.b16 %v304
        %v344 = vunpack.c.l.b16 %v305
        %v345 = vunpack.c.l.b16 %v306
        %v346 = vunpack.c.l.b16 %v307
        %v347 = vunpack.c.l.b16 %v308
        %v348 = vunpack.c.l.b16 %v309
        %v349 = vunpack.c.l.b16 %v310
        %v350 = vunpack.c.l.b16 %v311
        %v351 = vpack.c.b16 %v336, %v335
        %v352 = vpack.c.b16 %v338, %v337
        %v353 = vpack.c.b16 %v340, %v339
        %v354 = vpack.c.b16 %v342, %v341
        %v355 = vpack.c.b16 %v344, %v343
        %v356 = vpack.c.b16 %v346, %v345
        %v357 = vpack.c.b16 %v348, %v347
        %v358 = vpack.c.b16 %v350, %v349
        %367 = vmatprep.subr.bf16.mxu0 0
        %368 = vmatpush1.bf16.msra.mxu0 %v351
        %369 = vmatprep.subr.bf16.mxu0 0
        %370 = vmatpush1.bf16.msra.mxu0 %v352
        %371 = vmatprep.subr.bf16.mxu0 0
        %372 = vmatpush1.bf16.msra.mxu0 %v353
        %373 = vmatprep.subr.bf16.mxu0 0
        %374 = vmatpush1.bf16.msra.mxu0 %v354
        %375 = vmatprep.subr.bf16.mxu0 0
        %376 = vmatpush1.bf16.msra.mxu0 %v355
        %377 = vmatprep.subr.bf16.mxu0 0
        %378 = vmatpush1.bf16.msra.mxu0 %v356
        %379 = vmatprep.subr.bf16.mxu0 0
        %380 = vmatpush1.bf16.msra.mxu0 %v357
        %381 = vmatprep.subr.bf16.mxu0 0
        %382 = vmatpush1.bf16.msra.mxu0 %v358
        %383 = vmatprep.subr.bf16.mxu0 0
        %384 = vmatpush1.bf16.msra.mxu0 0
        %385 = vmatprep.subr.bf16.mxu0 0
        %386 = vmatpush1.bf16.msra.mxu0 0
        %387 = vmatprep.subr.bf16.mxu0 0
        %388 = vmatpush1.bf16.msra.mxu0 0
        %389 = vmatprep.subr.bf16.mxu0 0
        %390 = vmatpush1.bf16.msra.mxu0 0
        %391 = vmatprep.subr.bf16.mxu0 0
        %392 = vmatpush1.bf16.msra.mxu0 0
        %393 = vmatprep.subr.bf16.mxu0 0
        %394 = vmatpush1.bf16.msra.mxu0 0
        %395 = vmatprep.subr.bf16.mxu0 0
        %396 = vmatpush1.bf16.msra.mxu0 0
        %397 = vmatprep.subr.bf16.mxu0 0
        %398 = vmatpush1.bf16.msra.mxu0 0
        %399 = vmatprep.mubr.bf16.mxu0 0
        %400 = vmatmul.mubr.bf16.gmra.mrb[0].mxu0 %v295
        %v401 = vpop.f32.mrb[0].mxu0
        %v402 = vadd.f32 %v317, %v401
        %v403 = vpop.f32.mrb[0].mxu0
        %v404 = vpop.f32.mrb[0].mxu0
        %v405 = vpop.f32.mrb[0].mxu0
        %406 = vdwg.mxu0
        %v407 = vmax.f32 %v402, 0.0
        %v408 = vpack.c.bf16 %v407, %v407
        %v409 = vld [vmem:[#allocation8] sm:$0xf]
        %v410 = vld [vmem:[#allocation8 + $0x4] sm:$0xf]
        %v411 = vld [vmem:[#allocation8 + $0x8] sm:$0xf]
        %v412 = vld [vmem:[#allocation8 + $0xc] sm:$0xf]
        %v413 = vld [vmem:[#allocation8 + $0x10] sm:$0xf]
        %v414 = vld [vmem:[#allocation8 + $0x14] sm:$0xf]
        %v415 = vld [vmem:[#allocation8 + $0x18] sm:$0xf]
        %v416 = vld [vmem:[#allocation8 + $0x1c] sm:$0xf]
        %v417 = vld [vmem:[#allocation8 + $0x20] sm:$0xf]
        %v418 = vld [vmem:[#allocation8 + $0x24] sm:$0xf]
        %v419 = vld [vmem:[#allocation8 + $0x28] sm:$0xf]
        %v420 = vld [vmem:[#allocation8 + $0x2c] sm:$0xf]
        %v421 = vld [vmem:[#allocation8 + $0x30] sm:$0xf]
        %v422 = vld [vmem:[#allocation8 + $0x34] sm:$0xf]
        %v423 = vld [vmem:[#allocation8 + $0x38] sm:$0xf]
        %v424 = vld [vmem:[#allocation8 + $0x3c] sm:$0xf]
        %v425 = vld [vmem:[#allocation10] sm:$0x1]
        %v427 = vlaneseq
        %v428 = vshrl.u32 %v427, 7
        %v429 = vsub.s32 0, %v428
        %v430 = vrot.slane %v425, %v429
        %v448 = vunpack.c.l.b16 %v409
        %v449 = vunpack.c.l.b16 %v410
        %v450 = vunpack.c.l.b16 %v411
        %v451 = vunpack.c.l.b16 %v412
        %v452 = vunpack.c.l.b16 %v413
        %v453 = vunpack.c.l.b16 %v414
        %v454 = vunpack.c.l.b16 %v415
        %v455 = vunpack.c.l.b16 %v416
        %v456 = vunpack.c.l.b16 %v417
        %v457 = vunpack.c.l.b16 %v418
        %v458 = vunpack.c.l.b16 %v419
        %v459 = vunpack.c.l.b16 %v420
        %v460 = vunpack.c.l.b16 %v421
        %v461 = vunpack.c.l.b16 %v422
        %v462 = vunpack.c.l.b16 %v423
        %v463 = vunpack.c.l.b16 %v424
        %v464 = vpack.c.b16 %v449, %v448
        %v465 = vpack.c.b16 %v451, %v450
        %v466 = vpack.c.b16 %v453, %v452
        %v467 = vpack.c.b16 %v455, %v454
        %v468 = vpack.c.b16 %v457, %v456
        %v469 = vpack.c.b16 %v459, %v458
        %v470 = vpack.c.b16 %v461, %v460
        %v471 = vpack.c.b16 %v463, %v462
        %480 = vmatprep.subr.bf16.mxu0 0
        %481 = vmatpush1.bf16.msra.mxu0 %v464
        %482 = vmatprep.subr.bf16.mxu0 0
        %483 = vmatpush1.bf16.msra.mxu0 %v465
        %484 = vmatprep.subr.bf16.mxu0 0
        %485 = vmatpush1.bf16.msra.mxu0 %v466
        %486 = vmatprep.subr.bf16.mxu0 0
        %487 = vmatpush1.bf16.msra.mxu0 %v467
        %488 = vmatprep.subr.bf16.mxu0 0
        %489 = vmatpush1.bf16.msra.mxu0 %v468
        %490 = vmatprep.subr.bf16.mxu0 0
        %491 = vmatpush1.bf16.msra.mxu0 %v469
        %492 = vmatprep.subr.bf16.mxu0 0
        %493 = vmatpush1.bf16.msra.mxu0 %v470
        %494 = vmatprep.subr.bf16.mxu0 0
        %495 = vmatpush1.bf16.msra.mxu0 %v471
        %496 = vmatprep.subr.bf16.mxu0 0
        %497 = vmatpush1.bf16.msra.mxu0 0
        %498 = vmatprep.subr.bf16.mxu0 0
        %499 = vmatpush1.bf16.msra.mxu0 0
        %500 = vmatprep.subr.bf16.mxu0 0
        %501 = vmatpush1.bf16.msra.mxu0 0
        %502 = vmatprep.subr.bf16.mxu0 0
        %503 = vmatpush1.bf16.msra.mxu0 0
        %504 = vmatprep.subr.bf16.mxu0 0
        %505 = vmatpush1.bf16.msra.mxu0 0
        %506 = vmatprep.subr.bf16.mxu0 0
        %507 = vmatpush1.bf16.msra.mxu0 0
        %508 = vmatprep.subr.bf16.mxu0 0
        %509 = vmatpush1.bf16.msra.mxu0 0
        %510 = vmatprep.subr.bf16.mxu0 0
        %511 = vmatpush1.bf16.msra.mxu0 0
        %512 = vmatprep.mubr.bf16.mxu0 0
        %513 = vmatmul.mubr.bf16.gmra.mrb[0].mxu0 %v408
        %v514 = vpop.f32.mrb[0].mxu0
        %v515 = vadd.f32 %v430, %v514
        %v516 = vpop.f32.mrb[0].mxu0
        %v517 = vpop.f32.mrb[0].mxu0
        %v518 = vpop.f32.mrb[0].mxu0
        %519 = vdwg.mxu0
        %520 = vst [vmem:[%s293] sm:$0xff] %v515
        %s521 = sand.u32 %s142, 1
        %s522 = scalar_lea.sflag [#allocation4], %s521
        %s523 = sand.u32 %s142, 1
        %s524 = smul.addr %s523, 8
        %s525 = scalar_lea.vmem [#allocation11], %s524
        // Predicated region
        $region61: #{feed_forward.1} parent=39 // pred_check
          %p526 = pneg %p152
        $region62: #{feed_forward.1} parent=39 // pred_check_branch
          %528 = sbr.rel (%p526) target = $region64
        $region63: #{feed_forward.1} parent=39 // pred_region
          %s530 = ssub.s32 128, 128
          %531 = vsyncadd %s522, %s530
          %s532 = smul.addr %s24, 128
          %s533 = scalar_lea.hbm %s5, %s532
          %s535 = sshll.u32 %s525, 4
          %s536 = int_to_ptr.vmem [resolvable:$true] %s535
          %538 = dma.vmem_to_hbm [thread:$0]  %s536, 128, %s533, %s522
        $region64: #{feed_forward.1} parent=39 // pred_fallthru
          _
      $region40: #{feed_forward.1} parent=5 // pred_fallthru
        _
      %p539 = scmp.le.s32.totalorder 2, %s19
      // Predicated region
      $region65: #{feed_forward.1} parent=5 // pred_check
        %p540 = pneg %p539
      $region66: #{feed_forward.1} parent=5 // pred_check_branch
        %542 = sbr.rel (%p540) target = $region68
      $region67: #{feed_forward.1} parent=5 // pred_region
        %s543 = ssub.s32 %s19, 2
        // Predicated region
        $region69: #{feed_forward.1} parent=67 // pred_check
          %p544 = pneg %p158
        $region70: #{feed_forward.1} parent=67 // pred_check_branch
          %546 = sbr.rel (%p544) target = $region72
        $region71: #{feed_forward.1} parent=67 // pred_region
          %s547 = sand.u32 %s143, 1
          %s548 = scalar_lea.sflag [#allocation4], %s547
          %s549 = sand.u32 %s143, 1
          %s550 = smul.addr %s549, 8
          %s551 = scalar_lea.vmem [#allocation11], %s550
          %552 = dma.done %s548, 128
        $region72: #{feed_forward.1} parent=67 // pred_fallthru
          _
      $region68: #{feed_forward.1} parent=5 // pred_fallthru
        _
    $region6: #{feed_forward.1} parent=1 // loop_footer
      %s23 = sadd.s32 1, %s19
    $region7: #{feed_forward.1} parent=1 // loop_footer_branch
      %18 = sbr.rel target = $region3
    $region8: #{feed_forward.1} parent=1 // loop_exit
      _
    %553 = vsyncpa [#allocation3], 1
    %s554 = scalar_lea.sflag [#allocation3], 1
    %555 = vsyncpa %s554, 1
    %556 = vsyncpa [#allocation6], 1
    %557 = vsyncpa [#allocation9], 1
    %558 = vsyncpa [#allocation4], 1
    %s559 = scalar_lea.sflag [#allocation4], 1
    %560 = vsyncpa %s559, 1

</llo_original>
